<compile_context>
chip_gen: v7x
topology: tpu7x:2x2x1
jax: 0.10.0
libtpu: 0.0.40
codegen_flags: <defaults>
</compile_context>

<pallas_src>
import jax
import jax.numpy as jnp
from jax import lax
from jax.experimental import pallas as pl
from jax.experimental.pallas import tpu as pltpu

LANE = 128


def _round_up(x, m):
    return (x + m - 1) // m * m


def fused_contrast_kernel(x_ref, pos_ref, w_emb_ref, w_cls_ref, b_cls_ref,
                          seq_out_ref, logits_ref):
    """Fused pos-add + embedding matmul + cls-pooling + classifier head.

    x_ref:       (B, S, F)   original_seq
    pos_ref:     (S, F)      pos_code2 rows for position_ids = arange(S)
    w_emb_ref:   (Hp, F)     embedding weight, native (out,in) layout, H padded
    w_cls_ref:   (Lp, Hp)    classifier weight, native layout, padded
    b_cls_ref:   (1, Lp)     classifier bias, zero-padded
    seq_out_ref: (B, S, Hp)  embedding output (lane-dense slab)
    logits_ref:  (B, Lp)     classifier logits (lane-dense slab)
    """
    B, S, F = x_ref.shape
    Hp = w_emb_ref.shape[0]

    # Positional add on the VPU; (S, F) broadcasts over the batch dim.
    xp = x_ref[...] + pos_ref[...]                               # (B, S, F)

    # One tall matmul on the MXU: collapse (B, S) -> B*S rows (S is a multiple
    # of 8, so this is a layout-preserving sublane relabel, not data movement).
    # Weight stays in native (out, in) layout; contract over in_features of both.
    emds = lax.dot_general(
        xp.reshape(B * S, F), w_emb_ref[...],
        dimension_numbers=(((1,), (1,)), ((), ())),
        preferred_element_type=jnp.float32)                      # (B*S, Hp)
    emds = emds.reshape(B, S, Hp)
    seq_out_ref[...] = emds

    # PoolingLayer('cls') + eval-mode dropout (identity) + classifier head,
    # computed from the embedding output that is already resident in vregs.
    pooled = emds[:, 0, :]                                       # (B, Hp)
    logits = lax.dot_general(
        pooled, w_cls_ref[...],
        dimension_numbers=(((1,), (1,)), ((), ())),
        preferred_element_type=jnp.float32)                      # (B, Lp)
    logits_ref[...] = logits + b_cls_ref[...]


def contrast_model_forward(original_seq, pos_emb_table, w_embed, w_cls, b_cls):
    """Pallas implementation of ContrastModel.forward (labels=None, eval)."""
    B, S, F = original_seq.shape
    H = w_embed.shape[0]   # nn.Linear(fea_size, hidden_size, bias=False): (H, F)
    L = w_cls.shape[0]     # nn.Linear(hidden_size, num_labels): (L, H)

    # Lane-dense padding of the output feature dims.  Padded weight rows /
    # columns and bias entries are zero, and the extra output columns are
    # sliced off below, so the returned tensors are exactly (B,S,H) / (B,L).
    Hp = _round_up(H, LANE)
    Lp = _round_up(L, LANE)
    w_emb_p = jnp.pad(w_embed, ((0, Hp - H), (0, 0)))            # (Hp, F)
    w_cls_p = jnp.pad(w_cls, ((0, Lp - L), (0, Hp - H)))         # (Lp, Hp)
    b_cls_p = jnp.pad(b_cls, (0, Lp - L)).reshape(1, Lp)         # (1, Lp)

    # position_ids = arange(S); pos_code2(position_ids) is the first S table rows.
    pos_rows = pos_emb_table[:S]                                 # (S, F)

    flops = 2 * B * S * F * Hp + 2 * B * Hp * Lp
    bytes_accessed = 4 * (B * S * F + S * F + Hp * F + Lp * Hp + Lp
                          + B * S * Hp + B * Lp)

    seq_pad, logits_pad = pl.pallas_call(
        fused_contrast_kernel,
        out_shape=(jax.ShapeDtypeStruct((B, S, Hp), jnp.float32),
                   jax.ShapeDtypeStruct((B, Lp), jnp.float32)),
        grid=(1,),
        in_specs=[
            pl.BlockSpec((B, S, F), lambda i: (0, 0, 0)),
            pl.BlockSpec((S, F), lambda i: (0, 0)),
            pl.BlockSpec((Hp, F), lambda i: (0, 0)),
            pl.BlockSpec((Lp, Hp), lambda i: (0, 0)),
            pl.BlockSpec((1, Lp), lambda i: (0, 0)),
        ],
        out_specs=(
            pl.BlockSpec((B, S, Hp), lambda i: (0, 0, 0)),
            pl.BlockSpec((B, Lp), lambda i: (0, 0)),
        ),
        compiler_params=pltpu.CompilerParams(
            dimension_semantics=("arbitrary",)),
        cost_estimate=pl.CostEstimate(
            flops=flops, transcendentals=0, bytes_accessed=bytes_accessed),
    )(original_seq, pos_rows, w_emb_p, w_cls_p, b_cls_p)

    # TODO(synk): backbone `self.model = build_network(args.model_name, args)` is
    # not defined in the provided source; it is treated as identity here.
    seq_outputs = seq_pad[..., :H]
    logits = logits_pad[:, :L]

    # labels is None -> all loss terms are 0.0 (matches the PyTorch branch).
    return {
        "loss": 0.0,
        "ce_loss": 0.0,
        "graph_loss": 0.0,
        "rdrop_loss": 0.0,
        "logits": logits,
        "seq_outputs": seq_outputs,
    }


if __name__ == "__main__":
    # Small shapes consistent with the module's __init__:
    #   seq_len=S, fea_size=F, hidden_size=H, num_labels=L
    B, S, F, H, L = 2, 8, 32, 32, 4

    key = jax.random.PRNGKey(0)
    k1, k2, k3, k4, k5 = jax.random.split(key, 5)

    original_seq = jax.random.normal(k1, (B, S, F), jnp.float32)
    # nn.Embedding(seq_len, fea_size) weight table
    pos_emb_table = jax.random.normal(k2, (S, F), jnp.float32) * 0.02
    # nn.Linear(fea_size, hidden_size, bias=False) weight: (H, F)
    w_embed = jax.random.normal(k3, (H, F), jnp.float32) / jnp.sqrt(F)
    # nn.Linear(hidden_size, num_labels) weight/bias
    w_cls = jax.random.normal(k4, (L, H), jnp.float32) / jnp.sqrt(H)
    b_cls = jax.random.normal(k5, (L,), jnp.float32) * 0.01

    out = contrast_model_forward(original_seq, pos_emb_table, w_embed, w_cls, b_cls)
    jax.block_until_ready(out["logits"])
    jax.block_until_ready(out["seq_outputs"])

    # Pure-JAX reference check of the implemented path.
    ref_emds = (original_seq + pos_emb_table[None, :S]) @ w_embed.T
    ref_logits = ref_emds[:, 0, :] @ w_cls.T + b_cls
    assert out["seq_outputs"].shape == (B, S, H)
    assert out["logits"].shape == (B, L)
    assert jnp.allclose(out["seq_outputs"], ref_emds, atol=1e-5, rtol=1e-5)
    assert jnp.allclose(out["logits"], ref_logits, atol=1e-5, rtol=1e-5)

    print("KERNEL_OK")
</pallas_src>

<mosaic_0001>
module attributes {stable_mosaic.version = 11 : i64} {
  func.func @fused_contrast_kernel(%arg0: i32, %arg1: memref<2x8x32xf32, #tpu.memory_space<vmem>>, %arg2: memref<8x32xf32, #tpu.memory_space<vmem>>, %arg3: memref<128x32xf32, #tpu.memory_space<vmem>>, %arg4: memref<128x128xf32, #tpu.memory_space<vmem>>, %arg5: memref<1x128xf32, #tpu.memory_space<vmem>>, %arg6: memref<2x8x128xf32, #tpu.memory_space<vmem>>, %arg7: memref<2x128xf32, #tpu.memory_space<vmem>>) attributes {dimension_semantics = [#tpu.dimension_semantics<arbitrary>], iteration_bounds = array<i64: 1>, scalar_prefetch = 0 : i64, scratch_operands = 0 : i64, tpu.core_type = #tpu.core_type<tc>, window_params = [{pipeline_mode = #tpu.pipeline_mode<synchronous>, transform_indices = @transform_0, window_bounds = array<i64: 2, 8, 32>}, {pipeline_mode = #tpu.pipeline_mode<synchronous>, transform_indices = @transform_1, window_bounds = array<i64: 8, 32>}, {pipeline_mode = #tpu.pipeline_mode<synchronous>, transform_indices = @transform_2, window_bounds = array<i64: 128, 32>}, {pipeline_mode = #tpu.pipeline_mode<synchronous>, transform_indices = @transform_3, window_bounds = array<i64: 128, 128>}, {pipeline_mode = #tpu.pipeline_mode<synchronous>, transform_indices = @transform_4, window_bounds = array<i64: 1, 128>}, {pipeline_mode = #tpu.pipeline_mode<synchronous>, transform_indices = @transform_5, window_bounds = array<i64: 2, 8, 128>}, {pipeline_mode = #tpu.pipeline_mode<synchronous>, transform_indices = @transform_6, window_bounds = array<i64: 2, 128>}]} {
    %c0 = arith.constant 0 : index
    %c0_0 = arith.constant 0 : index
    %c0_1 = arith.constant 0 : index
    %0 = vector.load %arg1[%c0, %c0_0, %c0_1] : memref<2x8x32xf32, #tpu.memory_space<vmem>>, vector<2x8x32xf32>
    %c0_2 = arith.constant 0 : index
    %c0_3 = arith.constant 0 : index
    %1 = vector.load %arg2[%c0_2, %c0_3] : memref<8x32xf32, #tpu.memory_space<vmem>>, vector<8x32xf32>
    %2 = vector.shape_cast %1 : vector<8x32xf32> to vector<1x8x32xf32>
    %3 = vector.broadcast %2 : vector<1x8x32xf32> to vector<2x8x32xf32>
    %4 = arith.addf %0, %3 : vector<2x8x32xf32>
    %5 = vector.shape_cast %4 : vector<2x8x32xf32> to vector<16x32xf32>
    %c0_4 = arith.constant 0 : index
    %c0_5 = arith.constant 0 : index
    %6 = vector.load %arg3[%c0_4, %c0_5] : memref<128x32xf32, #tpu.memory_space<vmem>>, vector<128x32xf32>
    %cst = arith.constant dense<0.000000e+00> : vector<16x128xf32>
    %7 = tpu.matmul %5, %6, %cst {dimension_numbers = #tpu.dot_dimension_numbers<[1], [1], [0], [0], [0, 0, 1, 0], [], []>} : vector<16x32xf32>, vector<128x32xf32>, vector<16x128xf32> -> vector<16x128xf32>
    %8 = vector.shape_cast %7 : vector<16x128xf32> to vector<2x8x128xf32>
    %c0_6 = arith.constant 0 : index
    %c0_7 = arith.constant 0 : index
    %c0_8 = arith.constant 0 : index
    %9 = vector.load %arg6[%c0_6, %c0_7, %c0_8] : memref<2x8x128xf32, #tpu.memory_space<vmem>>, vector<2x8x128xf32>
    tpu.vector_store %arg6[%c0_6, %c0_7, %c0_8], %8 {strides = array<i32>} : memref<2x8x128xf32, #tpu.memory_space<vmem>>, vector<2x8x128xf32>,
    %10 = vector.extract_strided_slice %8 {offsets = [0, 0, 0], sizes = [2, 1, 128], strides = [1, 1, 1]} : vector<2x8x128xf32> to vector<2x1x128xf32>
    %11 = vector.shape_cast %10 : vector<2x1x128xf32> to vector<2x128xf32>
    %c0_9 = arith.constant 0 : index
    %c0_10 = arith.constant 0 : index
    %12 = vector.load %arg4[%c0_9, %c0_10] : memref<128x128xf32, #tpu.memory_space<vmem>>, vector<128x128xf32>
    %cst_11 = arith.constant dense<0.000000e+00> : vector<2x128xf32>
    %13 = tpu.matmul %11, %12, %cst_11 {dimension_numbers = #tpu.dot_dimension_numbers<[1], [1], [0], [0], [0, 0, 1, 0], [], []>} : vector<2x128xf32>, vector<128x128xf32>, vector<2x128xf32> -> vector<2x128xf32>
    %c0_12 = arith.constant 0 : index
    %c0_13 = arith.constant 0 : index
    %14 = vector.load %arg5[%c0_12, %c0_13] : memref<1x128xf32, #tpu.memory_space<vmem>>, vector<1x128xf32>
    %15 = vector.broadcast %14 : vector<1x128xf32> to vector<2x128xf32>
    %16 = arith.addf %13, %15 : vector<2x128xf32>
    %c0_14 = arith.constant 0 : index
    %c0_15 = arith.constant 0 : index
    %17 = vector.load %arg7[%c0_14, %c0_15] : memref<2x128xf32, #tpu.memory_space<vmem>>, vector<2x128xf32>
    tpu.vector_store %arg7[%c0_14, %c0_15], %16 {strides = array<i32>} : memref<2x128xf32, #tpu.memory_space<vmem>>, vector<2x128xf32>,
    return
  }
  func.func @transform_0(%arg0: i32) -> (i32, i32, i32) {
    %c0_i32 = arith.constant 0 : i32
    %c0_i32_0 = arith.constant 0 : i32
    %c0_i32_1 = arith.constant 0 : i32
    %c0_i32_2 = arith.constant 0 : i32
    return %c0_i32, %c0_i32_0, %c0_i32_1 : i32, i32, i32
  }
  func.func @transform_1(%arg0: i32) -> (i32, i32) {
    %c0_i32 = arith.constant 0 : i32
    %c0_i32_0 = arith.constant 0 : i32
    %c0_i32_1 = arith.constant 0 : i32
    return %c0_i32, %c0_i32_0 : i32, i32
  }
  func.func @transform_2(%arg0: i32) -> (i32, i32) {
    %c0_i32 = arith.constant 0 : i32
    %c0_i32_0 = arith.constant 0 : i32
    %c0_i32_1 = arith.constant 0 : i32
    return %c0_i32, %c0_i32_0 : i32, i32
  }
  func.func @transform_3(%arg0: i32) -> (i32, i32) {
    %c0_i32 = arith.constant 0 : i32
    %c0_i32_0 = arith.constant 0 : i32
    %c0_i32_1 = arith.constant 0 : i32
    return %c0_i32, %c0_i32_0 : i32, i32
  }
  func.func @transform_4(%arg0: i32) -> (i32, i32) {
    %c0_i32 = arith.constant 0 : i32
    %c0_i32_0 = arith.constant 0 : i32
    %c0_i32_1 = arith.constant 0 : i32
    return %c0_i32, %c0_i32_0 : i32, i32
  }
  func.func @transform_5(%arg0: i32) -> (i32, i32, i32) {
    %c0_i32 = arith.constant 0 : i32
    %c0_i32_0 = arith.constant 0 : i32
    %c0_i32_1 = arith.constant 0 : i32
    %c0_i32_2 = arith.constant 0 : i32
    return %c0_i32, %c0_i32_0, %c0_i32_1 : i32, i32, i32
  }
  func.func @transform_6(%arg0: i32) -> (i32, i32) {
    %c0_i32 = arith.constant 0 : i32
    %c0_i32_0 = arith.constant 0 : i32
    %c0_i32_1 = arith.constant 0 : i32
    return %c0_i32, %c0_i32_0 : i32, i32
  }
}

</mosaic_0001>

<llo_original>
// kernel: tpu_custom_call.1
$region0: #{tpu_custom_call.1}
  #allocation0 [shape = 'u32[]', space=smem, size = 0x4, offset = 0x4, fixed_abs, tag = 'smem constant byte address 0x4 - core index']
  #allocation1 [shape = 'u32[144,128]{1,0:T(1,128)}', space=vmem, size = 0x12000, scoped, tag = 'internal scratch']
  %s0 = inlined_call_operand.vmem [shape: f32[2,8,32], index: 0, kind: input, shape index: {}]
  %s1 = inlined_call_operand.vmem [shape: f32[8,32], index: 1, kind: input, shape index: {}]
  %s2 = inlined_call_operand.vmem [shape: f32[128,32], index: 2, kind: input, shape index: {}]
  %s3 = inlined_call_operand.vmem [shape: f32[128,128], index: 3, kind: input, shape index: {}]
  %s4 = inlined_call_operand.vmem [shape: f32[1,128], index: 4, kind: input, shape index: {}]
  %s5 = inlined_call_operand.hbm [shape: f32[2,8,128], index: 5, kind: output, shape index: {0}]
  %s6 = inlined_call_operand.hbm [shape: f32[2,128], index: 6, kind: output, shape index: {1}]
  %7 = xla_tuple %s5, %s6
  %s8 = sld [smem:[#allocation0]]
  $region38: #{tpu_custom_call.1} parent=0
    _
  %s10 = ssub.s32 1, %s8
  %s11 = scalar_select 0, %s10, %s8
  $region1: #{tpu_custom_call.1} parent=0
    #allocation2 [shape = 'u8[8192]{0}', space=vmem, size = 0x2000, scoped, tag = 'output window, operand 0, single buffered']
    #allocation3 [shape = 's32[1]{0}', space=sflag, size = 0x4, scoped, tag = 'scoped memory for tpu_custom_call.1']
    #allocation4 [shape = 'u8[1024]{0}', space=vmem, size = 0x400, scoped, tag = 'output window, operand 1, single buffered']
    #allocation5 [shape = 's32[1]{0}', space=sflag, size = 0x4, scoped, tag = 'scoped memory for tpu_custom_call.1']
    %12 = vsyncpa [#allocation3], 0
    %13 = vsyncpa [#allocation5], 0
    // Predicated region
    $region2: #{tpu_custom_call.1} parent=1 // pred_check
      _
    $region3: #{tpu_custom_call.1} parent=1 // pred_check_branch
      %15 = sbr.rel (0) target = $region5
    $region4: #{tpu_custom_call.1} parent=1 // pred_region
      _
    $region5: #{tpu_custom_call.1} parent=1 // pred_fallthru
      _
    // Predicated region
    $region6: #{tpu_custom_call.1} parent=1 // pred_check
      _
    $region7: #{tpu_custom_call.1} parent=1 // pred_check_branch
      %17 = sbr.rel (0) target = $region9
    $region8: #{tpu_custom_call.1} parent=1 // pred_region
      _
    $region9: #{tpu_custom_call.1} parent=1 // pred_fallthru
      _
    // Predicated region
    $region10: #{tpu_custom_call.1} parent=1 // pred_check
      _
    $region11: #{tpu_custom_call.1} parent=1 // pred_check_branch
      %19 = sbr.rel (0) target = $region13
    $region12: #{tpu_custom_call.1} parent=1 // pred_region
      _
    $region13: #{tpu_custom_call.1} parent=1 // pred_fallthru
      _
    // Predicated region
    $region14: #{tpu_custom_call.1} parent=1 // pred_check
      _
    $region15: #{tpu_custom_call.1} parent=1 // pred_check_branch
      %21 = sbr.rel (0) target = $region17
    $region16: #{tpu_custom_call.1} parent=1 // pred_region
      _
    $region17: #{tpu_custom_call.1} parent=1 // pred_fallthru
      _
    // Predicated region
    $region18: #{tpu_custom_call.1} parent=1 // pred_check
      _
    $region19: #{tpu_custom_call.1} parent=1 // pred_check_branch
      %23 = sbr.rel (0) target = $region21
    $region20: #{tpu_custom_call.1} parent=1 // pred_region
      _
    $region21: #{tpu_custom_call.1} parent=1 // pred_fallthru
      _
    %v24 = vld [vmem:[%s0] sm:$0xff]
    %v25 = vld [vmem:[%s0 + $0x8] sm:$0xff]
    %v26 = vld [vmem:[%s1] sm:$0xff]
    %v27 = vadd.f32 %v24, %v26
    %v28 = vadd.f32 %v25, %v26
    %v29 = vld [vmem:[%s2] sm:$0xff]
    %v30 = vld [vmem:[%s2 + $0x8] sm:$0xff]
    %v31 = vld [vmem:[%s2 + $0x10] sm:$0xff]
    %v32 = vld [vmem:[%s2 + $0x18] sm:$0xff]
    %v33 = vld [vmem:[%s2 + $0x20] sm:$0xff]
    %v34 = vld [vmem:[%s2 + $0x28] sm:$0xff]
    %v35 = vld [vmem:[%s2 + $0x30] sm:$0xff]
    %v36 = vld [vmem:[%s2 + $0x38] sm:$0xff]
    %v37 = vld [vmem:[%s2 + $0x40] sm:$0xff]
    %v38 = vld [vmem:[%s2 + $0x48] sm:$0xff]
    %v39 = vld [vmem:[%s2 + $0x50] sm:$0xff]
    %v40 = vld [vmem:[%s2 + $0x58] sm:$0xff]
    %v41 = vld [vmem:[%s2 + $0x60] sm:$0xff]
    %v42 = vld [vmem:[%s2 + $0x68] sm:$0xff]
    %v43 = vld [vmem:[%s2 + $0x70] sm:$0xff]
    %v44 = vld [vmem:[%s2 + $0x78] sm:$0xff]
    %vm45 = vcmask 261120
    %v47 = vsel %vm45, %v27, 0
    %v50 = vsel %vm45, %v28, 0
    %v53 = vsel %vm45, %v29, 0
    %v56 = vsel %vm45, %v30, 0
    %v59 = vsel %vm45, %v31, 0
    %v62 = vsel %vm45, %v32, 0
    %v65 = vsel %vm45, %v33, 0
    %v68 = vsel %vm45, %v34, 0
    %v71 = vsel %vm45, %v35, 0
    %v74 = vsel %vm45, %v36, 0
    %v77 = vsel %vm45, %v37, 0
    %v80 = vsel %vm45, %v38, 0
    %v83 = vsel %vm45, %v39, 0
    %v86 = vsel %vm45, %v40, 0
    %v89 = vsel %vm45, %v41, 0
    %v92 = vsel %vm45, %v42, 0
    %v95 = vsel %vm45, %v43, 0
    %v98 = vsel %vm45, %v44, 0
    %100 = vmatprep.subr.mxu0 0.0
    %101 = vmatpush1.xpose.msra.mxu0 %v53
    %102 = vmatprep.subr.mxu0 0.0
    %103 = vmatpush1.xpose.msra.mxu0 %v56
    %104 = vmatprep.subr.mxu0 0.0
    %105 = vmatpush1.xpose.msra.mxu0 %v59
    %106 = vmatprep.subr.mxu0 0.0
    %107 = vmatpush1.xpose.msra.mxu0 %v62
    %108 = vmatprep.subr.mxu0 0.0
    %109 = vmatpush1.xpose.msra.mxu0 %v65
    %110 = vmatprep.subr.mxu0 0.0
    %111 = vmatpush1.xpose.msra.mxu0 %v68
    %112 = vmatprep.subr.mxu0 0.0
    %113 = vmatpush1.xpose.msra.mxu0 %v71
    %114 = vmatprep.subr.mxu0 0.0
    %115 = vmatpush1.xpose.msra.mxu0 %v74
    %116 = vmatprep.subr.mxu0 0.0
    %117 = vmatpush1.xpose.msra.mxu0 %v77
    %118 = vmatprep.subr.mxu0 0.0
    %119 = vmatpush1.xpose.msra.mxu0 %v80
    %120 = vmatprep.subr.mxu0 0.0
    %121 = vmatpush1.xpose.msra.mxu0 %v83
    %122 = vmatprep.subr.mxu0 0.0
    %123 = vmatpush1.xpose.msra.mxu0 %v86
    %124 = vmatprep.subr.mxu0 0.0
    %125 = vmatpush1.xpose.msra.mxu0 %v89
    %126 = vmatprep.subr.mxu0 0.0
    %127 = vmatpush1.xpose.msra.mxu0 %v92
    %128 = vmatprep.subr.mxu0 0.0
    %129 = vmatpush1.xpose.msra.mxu0 %v95
    %130 = vmatprep.subr.mxu0 0.0
    %131 = vmatpush1.xpose.msra.mxu0 %v98
    %132 = vmatprep.subr.mxu0 0.0
    %133 = vmatpush1.xpose.msra.mxu0 0.0
    %134 = vmatprep.subr.mxu0 0.0
    %135 = vmatpush1.xpose.msra.mxu0 0.0
    %136 = vmatprep.subr.mxu0 0.0
    %137 = vmatpush1.xpose.msra.mxu0 0.0
    %138 = vmatprep.subr.mxu0 0.0
    %139 = vmatpush1.xpose.msra.mxu0 0.0
    %140 = vmatprep.subr.mxu0 0.0
    %141 = vmatpush1.xpose.msra.mxu0 0.0
    %142 = vmatprep.subr.mxu0 0.0
    %143 = vmatpush1.xpose.msra.mxu0 0.0
    %144 = vmatprep.subr.mxu0 0.0
    %145 = vmatpush1.xpose.msra.mxu0 0.0
    %146 = vmatprep.subr.mxu0 0.0
    %147 = vmatpush1.xpose.msra.mxu0 0.0
    %148 = vmatprep.subr.mxu0 0.0
    %149 = vmatpush1.xpose.msra.mxu0 0.0
    %150 = vmatprep.subr.mxu0 0.0
    %151 = vmatpush1.xpose.msra.mxu0 0.0
    %152 = vmatprep.subr.mxu0 0.0
    %153 = vmatpush1.xpose.msra.mxu0 0.0
    %154 = vmatprep.subr.mxu0 0.0
    %155 = vmatpush1.xpose.msra.mxu0 0.0
    %156 = vmatprep.subr.mxu0 0.0
    %157 = vmatpush1.xpose.msra.mxu0 0.0
    %158 = vmatprep.subr.mxu0 0.0
    %159 = vmatpush1.xpose.msra.mxu0 0.0
    %160 = vmatprep.subr.mxu0 0.0
    %161 = vmatpush1.xpose.msra.mxu0 0.0
    %162 = vmatprep.subr.mxu0 0.0
    %163 = vmatpush1.xpose.msra.mxu0 0.0
    %164 = vmatprep.mubr.f32.mxu0 0.0
    %165 = vmatmul.mubr.f32.gmra.mrb[0].mxu0 %v47
    %v166 = vpop.f32.mrb[0].mxu0
    %v167 = vadd.f32 0.0, %v166
    %v168 = vpop.f32.mrb[0].mxu0
    %169 = vmatprep.mubr.f32.mxu0 0.0
    %170 = vmatmul.mubr.f32.gmra.mrb[0].mxu0 %v50
    %v171 = vpop.f32.mrb[0].mxu0
    %v172 = vadd.f32 0.0, %v171
    %v173 = vpop.f32.mrb[0].mxu0
    %174 = vdwg.mxu0
    %175 = vst [vmem:[#allocation2] sm:$0xff] %v167
    %176 = vst [vmem:[#allocation2 + $0x8] sm:$0xff] %v172
    %v177 = vld [vmem:[%s3] sm:$0xff]
    %v178 = vld [vmem:[%s3 + $0x8] sm:$0xff]
    %v179 = vld [vmem:[%s3 + $0x10] sm:$0xff]
    %v180 = vld [vmem:[%s3 + $0x18] sm:$0xff]
    %v181 = vld [vmem:[%s3 + $0x20] sm:$0xff]
    %v182 = vld [vmem:[%s3 + $0x28] sm:$0xff]
    %v183 = vld [vmem:[%s3 + $0x30] sm:$0xff]
    %v184 = vld [vmem:[%s3 + $0x38] sm:$0xff]
    %v185 = vld [vmem:[%s3 + $0x40] sm:$0xff]
    %v186 = vld [vmem:[%s3 + $0x48] sm:$0xff]
    %v187 = vld [vmem:[%s3 + $0x50] sm:$0xff]
    %v188 = vld [vmem:[%s3 + $0x58] sm:$0xff]
    %v189 = vld [vmem:[%s3 + $0x60] sm:$0xff]
    %v190 = vld [vmem:[%s3 + $0x68] sm:$0xff]
    %v191 = vld [vmem:[%s3 + $0x70] sm:$0xff]
    %v192 = vld [vmem:[%s3 + $0x78] sm:$0xff]
    %v193 = vld [vmem:[%s4] sm:$0x1]
    %v195 = vlaneseq
    %v196 = vshrl.u32 %v195, 7
    %v197 = vsub.s32 0, %v196
    %v198 = vrot.slane %v193, %v197
    %v202 = vrot.slane %v172, 7
    %vm203 = vcmask 1041409
    %v204 = vsel %vm203, %v202, %v167
    %206 = vmatprep.subr.mxu0 0.0
    %207 = vmatpush1.xpose.msra.mxu0 %v177
    %208 = vmatprep.subr.mxu0 0.0
    %209 = vmatpush1.xpose.msra.mxu0 %v178
    %210 = vmatprep.subr.mxu0 0.0
    %211 = vmatpush1.xpose.msra.mxu0 %v179
    %212 = vmatprep.subr.mxu0 0.0
    %213 = vmatpush1.xpose.msra.mxu0 %v180
    %214 = vmatprep.subr.mxu0 0.0
    %215 = vmatpush1.xpose.msra.mxu0 %v181
    %216 = vmatprep.subr.mxu0 0.0
    %217 = vmatpush1.xpose.msra.mxu0 %v182
    %218 = vmatprep.subr.mxu0 0.0
    %219 = vmatpush1.xpose.msra.mxu0 %v183
    %220 = vmatprep.subr.mxu0 0.0
    %221 = vmatpush1.xpose.msra.mxu0 %v184
    %222 = vmatprep.subr.mxu0 0.0
    %223 = vmatpush1.xpose.msra.mxu0 %v185
    %224 = vmatprep.subr.mxu0 0.0
    %225 = vmatpush1.xpose.msra.mxu0 %v186
    %226 = vmatprep.subr.mxu0 0.0
    %227 = vmatpush1.xpose.msra.mxu0 %v187
    %228 = vmatprep.subr.mxu0 0.0
    %229 = vmatpush1.xpose.msra.mxu0 %v188
    %230 = vmatprep.subr.mxu0 0.0
    %231 = vmatpush1.xpose.msra.mxu0 %v189
    %232 = vmatprep.subr.mxu0 0.0
    %233 = vmatpush1.xpose.msra.mxu0 %v190
    %234 = vmatprep.subr.mxu0 0.0
    %235 = vmatpush1.xpose.msra.mxu0 %v191
    %236 = vmatprep.subr.mxu0 0.0
    %237 = vmatpush1.xpose.msra.mxu0 %v192
    %238 = vmatprep.subr.mxu0 0.0
    %239 = vmatpush1.xpose.msra.mxu0 0.0
    %240 = vmatprep.subr.mxu0 0.0
    %241 = vmatpush1.xpose.msra.mxu0 0.0
    %242 = vmatprep.subr.mxu0 0.0
    %243 = vmatpush1.xpose.msra.mxu0 0.0
    %244 = vmatprep.subr.mxu0 0.0
    %245 = vmatpush1.xpose.msra.mxu0 0.0
    %246 = vmatprep.subr.mxu0 0.0
    %247 = vmatpush1.xpose.msra.mxu0 0.0
    %248 = vmatprep.subr.mxu0 0.0
    %249 = vmatpush1.xpose.msra.mxu0 0.0
    %250 = vmatprep.subr.mxu0 0.0
    %251 = vmatpush1.xpose.msra.mxu0 0.0
    %252 = vmatprep.subr.mxu0 0.0
    %253 = vmatpush1.xpose.msra.mxu0 0.0
    %254 = vmatprep.subr.mxu0 0.0
    %255 = vmatpush1.xpose.msra.mxu0 0.0
    %256 = vmatprep.subr.mxu0 0.0
    %257 = vmatpush1.xpose.msra.mxu0 0.0
    %258 = vmatprep.subr.mxu0 0.0
    %259 = vmatpush1.xpose.msra.mxu0 0.0
    %260 = vmatprep.subr.mxu0 0.0
    %261 = vmatpush1.xpose.msra.mxu0 0.0
    %262 = vmatprep.subr.mxu0 0.0
    %263 = vmatpush1.xpose.msra.mxu0 0.0
    %264 = vmatprep.subr.mxu0 0.0
    %265 = vmatpush1.xpose.msra.mxu0 0.0
    %266 = vmatprep.subr.mxu0 0.0
    %267 = vmatpush1.xpose.msra.mxu0 0.0
    %268 = vmatprep.subr.mxu0 0.0
    %269 = vmatpush1.xpose.msra.mxu0 0.0
    %270 = vmatprep.mubr.f32.mxu0 0.0
    %271 = vmatmul.mubr.f32.gmra.mrb[0].mxu0 %v204
    %v272 = vpop.f32.mrb[0].mxu0
    %v273 = vadd.f32 %v198, %v272
    %v274 = vpop.f32.mrb[0].mxu0
    %275 = vdwg.mxu0
    %276 = vst [vmem:[#allocation4] sm:$0x3] %v273
    // Predicated region
    $region22: #{tpu_custom_call.1} parent=1 // pred_check
      _
    $region23: #{tpu_custom_call.1} parent=1 // pred_check_branch
      %278 = sbr.rel (0) target = $region25
    $region24: #{tpu_custom_call.1} parent=1 // pred_region
      %s280 = ssub.s32 256, 256
      %281 = vsyncadd [#allocation3], %s280
      %s282 = sshll.u32 [#allocation2], 4
      %s283 = int_to_ptr.vmem [resolvable:$true] %s282
      %288 = dma.vmem_to_hbm [thread:$0]  %s283, 256, %s5, [#allocation3], 128, 128, 8
    $region25: #{tpu_custom_call.1} parent=1 // pred_fallthru
      _
    // Predicated region
    $region26: #{tpu_custom_call.1} parent=1 // pred_check
      _
    $region27: #{tpu_custom_call.1} parent=1 // pred_check_branch
      %290 = sbr.rel (0) target = $region29
    $region28: #{tpu_custom_call.1} parent=1 // pred_region
      %s292 = ssub.s32 32, 32
      %293 = vsyncadd [#allocation5], %s292
      %s295 = sshll.u32 [#allocation4], 4
      %s296 = int_to_ptr.vmem [resolvable:$true] %s295
      %298 = dma.vmem_to_hbm [thread:$0]  %s296, 32, %s6, [#allocation5]
    $region29: #{tpu_custom_call.1} parent=1 // pred_fallthru
      _
    // Predicated region
    $region30: #{tpu_custom_call.1} parent=1 // pred_check
      _
    $region31: #{tpu_custom_call.1} parent=1 // pred_check_branch
      %300 = sbr.rel (0) target = $region33
    $region32: #{tpu_custom_call.1} parent=1 // pred_region
      %301 = dma.done [#allocation3], 256
    $region33: #{tpu_custom_call.1} parent=1 // pred_fallthru
      _
    // Predicated region
    $region34: #{tpu_custom_call.1} parent=1 // pred_check
      _
    $region35: #{tpu_custom_call.1} parent=1 // pred_check_branch
      %303 = sbr.rel (0) target = $region37
    $region36: #{tpu_custom_call.1} parent=1 // pred_region
      %304 = dma.done [#allocation5], 32
    $region37: #{tpu_custom_call.1} parent=1 // pred_fallthru
      _
    %305 = vsyncpa [#allocation3], 1
    %306 = vsyncpa [#allocation5], 1

</llo_original>
